<compile_context>
chip_gen: v7x
topology: tpu7x:2x2x1
jax: 0.10.0
libtpu: 0.0.40
codegen_flags: <defaults>
</compile_context>

<pallas_src>
import functools
import math

import jax
import jax.numpy as jnp
from jax.experimental import pallas as pl
from jax.experimental.pallas import tpu as pltpu

LANES = 128            # lane width of the reduction slab
MAX_BLOCK_ROWS = 2048  # up to 1 MiB (f32) per input block per grid step
ROW_ALIGN = 8          # sublane alignment


def _charbonnier_kernel(x_ref, y_ref, out_ref, acc_ref, *, eps,
                        block_rows, last_valid_rows):
    """Accumulate sum(sqrt((x-y)^2 + eps)) over the row-tiled slab."""
    i = pl.program_id(0)
    nblk = pl.num_programs(0)

    @pl.when(i == 0)
    def _init():
        acc_ref[...] = jnp.zeros_like(acc_ref)

    xv = x_ref[...].astype(jnp.float32)
    yv = y_ref[...].astype(jnp.float32)
    diff = xv - yv
    val = jnp.sqrt(diff * diff + jnp.float32(eps))

    if last_valid_rows == block_rows:
        # All blocks are full: no masking anywhere.
        acc_ref[...] += jnp.sum(val, axis=0, keepdims=True)
    else:
        @pl.when(i < nblk - 1)
        def _full():
            acc_ref[...] += jnp.sum(val, axis=0, keepdims=True)

        @pl.when(i == nblk - 1)
        def _partial():
            # Rows past `last_valid_rows` hold unspecified (padded) data in
            # the final block; zero them before accumulating.
            rows = jax.lax.broadcasted_iota(jnp.int32, val.shape, 0)
            masked = jnp.where(rows < last_valid_rows, val, jnp.float32(0.0))
            acc_ref[...] += jnp.sum(masked, axis=0, keepdims=True)

    @pl.when(i == nblk - 1)
    def _finalize():
        # Single cross-lane reduce, once, into the SMEM scalar output.
        out_ref[0, 0] = jnp.sum(acc_ref[...])


def charbonnier_loss(x, y, eps=1e-06):
    """x, y: NCHW arrays of identical shape. Returns scalar loss (float32)."""
    assert x.shape == y.shape
    n = math.prod(x.shape)

    xf = x.reshape(-1)
    yf = y.reshape(-1)

    align = ROW_ALIGN * LANES  # 1024
    pad = (-n) % align
    if pad:
        # Rare path (numel not a multiple of 1024): pad with < 1024 zeros and
        # correct the sum arithmetically below (each pad elem adds sqrt(eps)).
        xf = jnp.pad(xf, (0, pad))
        yf = jnp.pad(yf, (0, pad))
    n_padded = n + pad

    nrows = n_padded // LANES                      # multiple of 8
    block_rows = min(MAX_BLOCK_ROWS, nrows)        # multiple of 8
    nblk = pl.cdiv(nrows, block_rows)
    last_valid_rows = nrows - (nblk - 1) * block_rows

    xm = xf.reshape(nrows, LANES)   # no-copy reshape (contiguous, row-major)
    ym = yf.reshape(nrows, LANES)

    kernel = functools.partial(
        _charbonnier_kernel,
        eps=float(eps),
        block_rows=block_rows,
        last_valid_rows=last_valid_rows,
    )

    total = pl.pallas_call(
        kernel,
        out_shape=jax.ShapeDtypeStruct((1, 1), jnp.float32),
        grid_spec=pltpu.PrefetchScalarGridSpec(
            num_scalar_prefetch=0,
            grid=(nblk,),
            in_specs=[
                pl.BlockSpec((block_rows, LANES), lambda i: (i, 0)),
                pl.BlockSpec((block_rows, LANES), lambda i: (i, 0)),
            ],
            out_specs=pl.BlockSpec((1, 1), lambda i: (0, 0),
                                   memory_space=pltpu.SMEM),
            scratch_shapes=[pltpu.VMEM((1, LANES), jnp.float32)],
        ),
        compiler_params=pltpu.CompilerParams(
            dimension_semantics=("arbitrary",)
        ),
    )(xm, ym)[0, 0]

    if pad:
        # Zero-padded elements each contributed sqrt(0 + eps); remove them.
        total = total - jnp.float32(pad) * jnp.sqrt(jnp.float32(eps))

    # TODO(synk): on v7x, shard the row range across the 2 TensorCores with a
    # leading "parallel" grid axis producing per-core partial sums.

    return (total / jnp.float32(n)).astype(jnp.float32)


if __name__ == "__main__":
    key = jax.random.PRNGKey(0)
    kx, ky = jax.random.split(key)
    B, C, H, W = 2, 4, 16, 16
    x = jax.random.normal(kx, (B, C, H, W), dtype=jnp.float32)
    y = jax.random.normal(ky, (B, C, H, W), dtype=jnp.float32)

    loss = jax.block_until_ready(charbonnier_loss(x, y, eps=1e-06))

    # Pure-JAX reference check.
    diff = x - y
    ref = jnp.sum(jnp.sqrt(diff * diff + 1e-06)) / (B * C * H * W)
    assert jnp.allclose(loss, ref, rtol=1e-5, atol=1e-6), (loss, ref)

    print("KERNEL_OK")
</pallas_src>

<mosaic_0001>
module attributes {stable_mosaic.version = 11 : i64} {
  func.func @_charbonnier_kernel(%arg0: i32, %arg1: memref<16x128xf32, #tpu.memory_space<vmem>>, %arg2: memref<16x128xf32, #tpu.memory_space<vmem>>, %arg3: memref<1x1xf32, #tpu.memory_space<smem>>, %arg4: memref<1x128xf32, #tpu.memory_space<vmem>>) attributes {dimension_semantics = [#tpu.dimension_semantics<arbitrary>], iteration_bounds = array<i64: 1>, scalar_prefetch = 0 : i64, scratch_operands = 1 : i64, tpu.core_type = #tpu.core_type<tc>, window_params = [{transform_indices = @transform_0, window_bounds = array<i64: 16, 128>}, {transform_indices = @transform_1, window_bounds = array<i64: 16, 128>}, {transform_indices = @transform_2, window_bounds = array<i64: 1, 1>}]} {
    %c0_i32 = arith.constant 0 : i32
    %0 = arith.cmpi eq, %arg0, %c0_i32 : i32
    %1 = arith.extui %0 : i1 to i32
    %c0_i32_0 = arith.constant 0 : i32
    %2 = arith.cmpi ne, %1, %c0_i32_0 : i32
    scf.if %2 {
      %cst_11 = arith.constant 0.000000e+00 : f32
      %18 = vector.broadcast %cst_11 : f32 to vector<1x128xf32>
      %c0_12 = arith.constant 0 : index
      %c0_13 = arith.constant 0 : index
      %19 = vector.load %arg4[%c0_12, %c0_13] : memref<1x128xf32, #tpu.memory_space<vmem>>, vector<1x128xf32>
      tpu.vector_store %arg4[%c0_12, %c0_13], %18 {strides = array<i32>} : memref<1x128xf32, #tpu.memory_space<vmem>>, vector<1x128xf32>,
    } else {
    }
    %c0 = arith.constant 0 : index
    %c0_1 = arith.constant 0 : index
    %3 = vector.load %arg1[%c0, %c0_1] : memref<16x128xf32, #tpu.memory_space<vmem>>, vector<16x128xf32>
    %c0_2 = arith.constant 0 : index
    %c0_3 = arith.constant 0 : index
    %4 = vector.load %arg2[%c0_2, %c0_3] : memref<16x128xf32, #tpu.memory_space<vmem>>, vector<16x128xf32>
    %5 = arith.subf %3, %4 : vector<16x128xf32>
    %6 = arith.mulf %5, %5 : vector<16x128xf32>
    %cst = arith.constant 9.99999997E-7 : f32
    %7 = vector.broadcast %cst : f32 to vector<16x128xf32>
    %8 = arith.addf %6, %7 : vector<16x128xf32>
    %9 = math.sqrt %8 : vector<16x128xf32>
    %c0_4 = arith.constant 0 : index
    %c0_5 = arith.constant 0 : index
    %10 = vector.load %arg4[%c0_4, %c0_5] : memref<1x128xf32, #tpu.memory_space<vmem>>, vector<1x128xf32>
    %cst_6 = arith.constant dense<0.000000e+00> : vector<128xf32>
    %11 = vector.multi_reduction <add>, %9, %cst_6 [0] : vector<16x128xf32> to vector<128xf32>
    %12 = vector.shape_cast %11 : vector<128xf32> to vector<1x128xf32>
    %13 = arith.addf %10, %12 : vector<1x128xf32>
    %c0_7 = arith.constant 0 : index
    %c0_8 = arith.constant 0 : index
    %14 = vector.load %arg4[%c0_7, %c0_8] : memref<1x128xf32, #tpu.memory_space<vmem>>, vector<1x128xf32>
    tpu.vector_store %arg4[%c0_7, %c0_8], %13 {strides = array<i32>} : memref<1x128xf32, #tpu.memory_space<vmem>>, vector<1x128xf32>,
    %c0_i32_9 = arith.constant 0 : i32
    %15 = arith.cmpi eq, %arg0, %c0_i32_9 : i32
    %16 = arith.extui %15 : i1 to i32
    %c0_i32_10 = arith.constant 0 : i32
    %17 = arith.cmpi ne, %16, %c0_i32_10 : i32
    scf.if %17 {
      %c0_11 = arith.constant 0 : index
      %c0_12 = arith.constant 0 : index
      %18 = vector.load %arg4[%c0_11, %c0_12] : memref<1x128xf32, #tpu.memory_space<vmem>>, vector<1x128xf32>
      %19 = vector.shape_cast %18 : vector<1x128xf32> to vector<1x1x128xf32>
      %cst_13 = arith.constant dense<0.000000e+00> : vector<1xf32>
      %20 = vector.multi_reduction <add>, %19, %cst_13 [1, 2] : vector<1x1x128xf32> to vector<1xf32>
      %21 = vector.shape_cast %20 : vector<1xf32> to vector<1x1x1xf32>
      %22 = vector.extract %21[0, 0, 0] : f32 from vector<1x1x1xf32>
      %c0_14 = arith.constant 0 : index
      %c0_15 = arith.constant 0 : index
      %23 = memref.load %arg3[%c0_14, %c0_15] : memref<1x1xf32, #tpu.memory_space<smem>>
      memref.store %22, %arg3[%c0_14, %c0_15] : memref<1x1xf32, #tpu.memory_space<smem>>
    } else {
    }
    return
  }
  func.func @transform_0(%arg0: i32) -> (i32, i32) {
    %c0_i32 = arith.constant 0 : i32
    %c0_i32_0 = arith.constant 0 : i32
    return %arg0, %c0_i32 : i32, i32
  }
  func.func @transform_1(%arg0: i32) -> (i32, i32) {
    %c0_i32 = arith.constant 0 : i32
    %c0_i32_0 = arith.constant 0 : i32
    return %arg0, %c0_i32 : i32, i32
  }
  func.func @transform_2(%arg0: i32) -> (i32, i32) {
    %c0_i32 = arith.constant 0 : i32
    %c0_i32_0 = arith.constant 0 : i32
    %c0_i32_1 = arith.constant 0 : i32
    return %c0_i32, %c0_i32_0 : i32, i32
  }
}

</mosaic_0001>

<llo_original>
// kernel: tpu_custom_call.1
$region0: #{tpu_custom_call.1}
  #allocation0 [shape = 'u32[]', space=smem, size = 0x4, offset = 0x4, fixed_abs, tag = 'smem constant byte address 0x4 - core index']
  #allocation1 [shape = 'u32[144,128]{1,0:T(1,128)}', space=vmem, size = 0x12000, scoped, tag = 'internal scratch']
  #allocation2 [shape = 'f32[1,128]{1,0:T(1,128)}', space=vmem, size = 0x200, scoped, tag = 'scratch operand']
  %s0 = inlined_call_operand.hbm [shape: f32[16,128], index: 0, kind: input, shape index: {}]
  %s1 = inlined_call_operand.hbm [shape: f32[16,128], index: 1, kind: input, shape index: {}]
  %s2 = inlined_call_operand.hbm [shape: f32[1,1], index: 2, kind: output, shape index: {}]
  %s3 = sld [smem:[#allocation0]]
  $region34: #{tpu_custom_call.1} parent=0
    _
  %s5 = ssub.s32 1, %s3
  %s6 = scalar_select 0, %s5, %s3
  $region1: #{tpu_custom_call.1} parent=0
    #allocation3 [shape = 'u8[8192]{0}', space=vmem, size = 0x2000, scoped, tag = 'input window, operand 0, single buffered']
    #allocation4 [shape = 's32[1]{0}', space=sflag, size = 0x4, scoped, tag = 'scoped memory for tpu_custom_call.1']
    #allocation5 [shape = 's32[1]{0}', space=sflag, size = 0x4, scoped, tag = 'scoped memory for tpu_custom_call.1']
    #allocation6 [shape = 'u8[8192]{0}', space=vmem, size = 0x2000, scoped, tag = 'input window, operand 1, single buffered']
    #allocation7 [shape = 's32[1]{0}', space=sflag, size = 0x4, scoped, tag = 'scoped memory for tpu_custom_call.1']
    #allocation8 [shape = 'u8[512]{0}', space=smem, size = 0x200, scoped, tag = 'output window, operand 0, single buffered']
    %7 = vsyncpa [#allocation4], 0
    %8 = vsyncpa [#allocation7], 0
    %9 = vsyncpa [#allocation5], 0
    // Predicated region
    $region2: #{tpu_custom_call.1} parent=1 // pred_check
      _
    $region3: #{tpu_custom_call.1} parent=1 // pred_check_branch
      %11 = sbr.rel (0) target = $region5
    $region4: #{tpu_custom_call.1} parent=1 // pred_region
      %s13 = ssub.s32 256, 256
      %14 = vsyncadd [#allocation4], %s13
      %s15 = sshll.u32 [#allocation3], 4
      %s16 = int_to_ptr.vmem [resolvable:$true] %s15
      %21 = dma.hbm_to_vmem [thread:$0]  %s0, 256, %s16, [#allocation4], 128, 128, 8
    $region5: #{tpu_custom_call.1} parent=1 // pred_fallthru
      _
    // Predicated region
    $region6: #{tpu_custom_call.1} parent=1 // pred_check
      _
    $region7: #{tpu_custom_call.1} parent=1 // pred_check_branch
      %23 = sbr.rel (0) target = $region9
    $region8: #{tpu_custom_call.1} parent=1 // pred_region
      %s25 = ssub.s32 256, 256
      %26 = vsyncadd [#allocation7], %s25
      %s27 = sshll.u32 [#allocation6], 4
      %s28 = int_to_ptr.vmem [resolvable:$true] %s27
      %33 = dma.hbm_to_vmem [thread:$0]  %s1, 256, %s28, [#allocation7], 128, 128, 8
    $region9: #{tpu_custom_call.1} parent=1 // pred_fallthru
      _
    // Predicated region
    $region10: #{tpu_custom_call.1} parent=1 // pred_check
      _
    $region11: #{tpu_custom_call.1} parent=1 // pred_check_branch
      %35 = sbr.rel (0) target = $region13
    $region12: #{tpu_custom_call.1} parent=1 // pred_region
      %36 = dma.done [#allocation4], 256
    $region13: #{tpu_custom_call.1} parent=1 // pred_fallthru
      _
    // Predicated region
    $region14: #{tpu_custom_call.1} parent=1 // pred_check
      _
    $region15: #{tpu_custom_call.1} parent=1 // pred_check_branch
      %38 = sbr.rel (0) target = $region17
    $region16: #{tpu_custom_call.1} parent=1 // pred_region
      %39 = dma.done [#allocation7], 256
    $region17: #{tpu_custom_call.1} parent=1 // pred_fallthru
      _
    %p40 = scmp.eq.s32.totalorder 0, 0
    // Predicated region
    $region18: #{tpu_custom_call.1} parent=1 // pred_check
      %p41 = pneg %p40
    $region19: #{tpu_custom_call.1} parent=1 // pred_check_branch
      %43 = sbr.rel (%p41) target = $region21
    $region20: #{tpu_custom_call.1} parent=1 // pred_region
      %44 = vst [vmem:[#allocation2] sm:$0x1] 0.0
    $region21: #{tpu_custom_call.1} parent=1 // pred_fallthru
      _
    %v45 = vld [vmem:[#allocation3] sm:$0xff]
    %v46 = vld [vmem:[#allocation3 + $0x8] sm:$0xff]
    %v47 = vld [vmem:[#allocation6] sm:$0xff]
    %v48 = vld [vmem:[#allocation6 + $0x8] sm:$0xff]
    %v49 = vsub.f32 %v45, %v47
    %v50 = vsub.f32 %v46, %v48
    %v51 = vmul.f32 %v49, %v49
    %v52 = vmul.f32 %v50, %v50
    %v53 = vadd.f32 %v51, 1e-06
    %v54 = vadd.f32 %v52, 1e-06
    %v55 = vrsqrt.pop %v53
    %v56 = vmul.f32 %v53, %v55
    %vm57 = vcmp.eq.f32.partialorder %v53, inf
    %v58 = vsel %vm57, %v53, %v56
    %vm59 = vcmp.eq.f32.partialorder %v53, 0.0
    %v60 = vand.u32 %v53, 2147483648
    %v61 = vsel %vm59, %v60, %v58
    %v62 = vrsqrt.pop %v54
    %v63 = vmul.f32 %v54, %v62
    %vm64 = vcmp.eq.f32.partialorder %v54, inf
    %v65 = vsel %vm64, %v54, %v63
    %vm66 = vcmp.eq.f32.partialorder %v54, 0.0
    %v67 = vand.u32 %v54, 2147483648
    %v68 = vsel %vm66, %v67, %v65
    %v69 = vld [vmem:[#allocation2] sm:$0x1]
    %v70 = vadd.f32 %v61, %v68
    %v71 = vrot.slane %v70, 4
    %v72 = vadd.f32 %v70, %v71
    %v73 = vrot.slane %v72, 2
    %v74 = vadd.f32 %v72, %v73
    %v75 = vrot.slane %v74, 1
    %v76 = vadd.f32 %v74, %v75
    %v77 = vadd.f32 %v69, %v76
    %78 = vst [vmem:[#allocation2] sm:$0x1] %v77
    // Predicated region
    $region22: #{tpu_custom_call.1} parent=1 // pred_check
      %p79 = pneg %p40
    $region23: #{tpu_custom_call.1} parent=1 // pred_check_branch
      %81 = sbr.rel (%p79) target = $region25
    $region24: #{tpu_custom_call.1} parent=1 // pred_region
      %v82 = vld [vmem:[#allocation2] sm:$0x1]
      %vm83 = vcmask 1040384
      %v84 = vsel %vm83, %v82, 0.0
      %85 = vadd.xlane.f32.xlu0 %v84
      %v86 = vpop.xlane.xlu0 %85
      %v87 = vrot.slane %v86, 4
      %v88 = vadd.f32 %v86, %v87
      %v89 = vrot.slane %v88, 2
      %v90 = vadd.f32 %v88, %v89
      %v91 = vrot.slane %v90, 1
      %v92 = vadd.f32 %v90, %v91
      %s93 = vtos %v92
      %s94 = scalar_lea.smem [#allocation8], 0
      %95 = sst [smem:[%s94]] %s93
    $region25: #{tpu_custom_call.1} parent=1 // pred_fallthru
      _
    // Predicated region
    $region26: #{tpu_custom_call.1} parent=1 // pred_check
      _
    $region27: #{tpu_custom_call.1} parent=1 // pred_check_branch
      %97 = sbr.rel (0) target = $region29
    $region28: #{tpu_custom_call.1} parent=1 // pred_region
      %s99 = ssub.s32 16, 16
      %100 = vsyncadd [#allocation5], %s99
      %103 = dma.smem_to_hbm [#allocation8], 16, %s2, [#allocation5]
    $region29: #{tpu_custom_call.1} parent=1 // pred_fallthru
      _
    // Predicated region
    $region30: #{tpu_custom_call.1} parent=1 // pred_check
      _
    $region31: #{tpu_custom_call.1} parent=1 // pred_check_branch
      %105 = sbr.rel (0) target = $region33
    $region32: #{tpu_custom_call.1} parent=1 // pred_region
      %106 = dma.done [#allocation5], 16
    $region33: #{tpu_custom_call.1} parent=1 // pred_fallthru
      _
    %107 = sfence
    %108 = vsyncpa [#allocation4], 1
    %109 = vsyncpa [#allocation7], 1
    %110 = vsyncpa [#allocation5], 1

</llo_original>
